<compile_context>
chip_gen: v7x
topology: tpu7x:2x2x1
jax: 0.10.0
libtpu: 0.0.40
codegen_flags: <defaults>
</compile_context>

<pallas_src>
import functools

import jax
import jax.numpy as jnp
from jax import lax
from jax.experimental import pallas as pl
from jax.experimental.pallas import tpu as pltpu

KH = 1   # kernel height (CAUNet uses kernel_size=(1,3))
KW = 3   # kernel width  (module hard-codes padding=(0,1) to match)


def _spconv_subpixel_kernel(x_ref, p_ref, s_ref, o_ref, *, W, r, cout):
    # x_ref: (Cin, Lt)            VMEM  lane-flattened input rows, Lt = Ht*W
    # p_ref: (CoutR, Cin*KW + 1)  VMEM  conv weights + bias column (f32), resident
    # s_ref: (r*Lt, r*Lt)         VMEM  0/1 sub-pixel spread matrix (bf16), resident
    # o_ref: (Cout, r*Lt)         VMEM  lane-flattened output rows (Ht * W * r lanes)
    cin, lt = x_ref.shape
    cout_r = p_ref.shape[0]

    x = x_ref[...].astype(jnp.float32)

    # Width position of every flattened lane.  The masks fold in the conv's (0,1) width
    # padding AND kill the cross-row wrap of the lane rolls (review #1).
    wpos = lax.broadcasted_iota(jnp.int32, (cin, lt), 1) % W
    x_m1 = jnp.where(wpos == 0, 0.0, pltpu.roll(x, 1, axis=1))            # x[.., w-1]
    x_p1 = jnp.where(wpos == W - 1, 0.0, pltpu.roll(x, lt - 1, axis=1))   # x[.., w+1]
    taps = (x_m1, x, x_p1)                                                # tap kw -> x[w+kw-1]

    # Conv for all Cout*r channels at once: sum of Cin*KW outer products
    # (CoutR,1) x (1,Lt) -> full-vreg VPU FMAs, exact f32.
    p = p_ref[...]
    acc = jnp.zeros((cout_r, lt), jnp.float32) + p[:, cin * KW:cin * KW + 1]   # bias column
    for ci in range(cin):
        for kw in range(KW):
            wcol = p[:, ci * KW + kw:ci * KW + kw + 1]        # (CoutR, 1)
            acc = acc + wcol * taps[kw][ci:ci + 1, :]         # broadcast FMA on (CoutR, Lt)

    # Regroup channels so one matmul does the whole sub-pixel interleave (review #3):
    #   ablk[co, rr*Lt + l] = acc[rr*Cout + co, l]
    ablk = jnp.concatenate(
        [acc[rr * cout:(rr + 1) * cout, :] for rr in range(r)], axis=1)   # (Cout, r*Lt)

    s = s_ref[...]                                                        # 0/1, bf16-exact
    if o_ref.dtype == jnp.float32:
        # Exact spread for f32 outputs: bf16 3-split (hi+mid+lo reconstructs ablk) pushed
        # through the 0/1 matrix with f32 accumulation.  Operands pinned to bf16 so each
        # dot is exactly one MXU pass on every generation (review #4, #5).
        hi = ablk.astype(jnp.bfloat16)
        rem = ablk - hi.astype(jnp.float32)
        mid = rem.astype(jnp.bfloat16)
        lo = (rem - mid.astype(jnp.float32)).astype(jnp.bfloat16)
        out = (jnp.dot(hi, s, preferred_element_type=jnp.float32)
               + jnp.dot(mid, s, preferred_element_type=jnp.float32)
               + jnp.dot(lo, s, preferred_element_type=jnp.float32))
    else:
        # bf16-class outputs: the spread is a 0/1 permutation, so permute-then-round ==
        # round-then-permute and a single hi-only pass is bit-identical (review #4).
        out = jnp.dot(ablk.astype(jnp.bfloat16), s, preferred_element_type=jnp.float32)

    o_ref[...] = out.astype(o_ref.dtype)   # full-width, lane-dense store


def _pick_h_tile(B, H, W):
    """Ht with H % Ht == 0 and lane block Lt = Ht*W a multiple of 128 (lane-dense), capped
    at 512 lanes (bounds the resident spread matrix and vreg pressure, review #6), preferring
    >= 4 total grid steps so both v7x TensorCores get work and the pipeline has depth (#7)."""
    cands = [ht for ht in range(1, H + 1)
             if H % ht == 0 and (ht * W) % 128 == 0 and ht * W <= 512]
    if not cands:
        cands = [ht for ht in range(1, H + 1) if H % ht == 0 and (ht * W) % 128 == 0]
        return min(cands) if cands else H   # last resort: full flattened block (still legal)
    pref = [ht for ht in cands if B * (H // ht) >= 4]
    return max(pref) if pref else min(cands)


def sp_conv_transpose2d(x_nchw, weight_oihw, bias, r):
    """x_nchw: (B, Cin, H, W); weight_oihw: (Cout*r, Cin, 1, 3); bias: (Cout*r,)."""
    B, Cin, H, W = x_nchw.shape
    CoutR, Cin_w, KH_w, KW_w = weight_oihw.shape
    assert Cin_w == Cin and KH_w == KH and KW_w == KW and CoutR % r == 0
    Cout = CoutR // r
    Wr = W * r

    Ht = _pick_h_tile(B, H, W)
    Lt = Ht * W           # input lanes per block
    Ltr = Ht * Wr         # output lanes per block (= r * Lt)

    # Free, contiguous metadata reshapes -> lane-dense block minor dims (review #1).
    x_flat = x_nchw.reshape(B, Cin, H * W)

    # Conv parameters as one tiny resident VMEM table: p[c, ci*KW+kw] = w[c,ci,0,kw], p[:,-1]=bias.
    params = jnp.concatenate(
        [weight_oihw[:, :, 0, :].reshape(CoutR, Cin * KW).astype(jnp.float32),
         bias.astype(jnp.float32)[:, None]], axis=1)

    # 0/1 sub-pixel spread matrix, built once in the wrapper (review #2):
    #   S[rr*Lt + l, l*r + rr] = 1   (exactly representable in bf16).
    k_idx = jnp.arange(r * Lt, dtype=jnp.int32)
    dst = (k_idx % Lt) * r + k_idx // Lt
    sblk = (jnp.arange(Ltr, dtype=jnp.int32)[None, :] == dst[:, None]).astype(jnp.bfloat16)

    n_split = 3 if x_nchw.dtype == jnp.float32 else 1
    n_tiles = B * (H // Ht)
    cost = pl.CostEstimate(
        flops=int(2 * B * H * W * KW * Cin * CoutR                   # conv (VPU)
                  + 2 * n_tiles * Cout * (r * Lt) * Ltr * n_split),  # spread (MXU)
        transcendentals=0,
        bytes_accessed=int(x_nchw.size * x_nchw.dtype.itemsize
                           + params.size * 4 + sblk.size * 2
                           + B * Cout * H * Wr * x_nchw.dtype.itemsize),
    )

    kernel = functools.partial(_spconv_subpixel_kernel, W=W, r=r, cout=Cout)

    out_flat = pl.pallas_call(
        kernel,
        out_shape=jax.ShapeDtypeStruct((B, Cout, H * Wr), x_nchw.dtype),
        grid_spec=pltpu.PrefetchScalarGridSpec(
            num_scalar_prefetch=0,
            grid=(B, H // Ht),
            in_specs=[
                pl.BlockSpec((None, Cin, Lt), lambda b, h: (b, 0, h)),
                pl.BlockSpec((CoutR, Cin * KW + 1), lambda b, h: (0, 0)),   # resident params
                pl.BlockSpec((r * Lt, Ltr), lambda b, h: (0, 0)),           # resident spread
            ],
            out_specs=pl.BlockSpec((None, Cout, Ltr), lambda b, h: (b, 0, h)),
        ),
        compiler_params=pltpu.CompilerParams(
            dimension_semantics=("parallel", "parallel")),
        cost_estimate=cost,
    )(x_flat, params, sblk)

    return out_flat.reshape(B, Cout, H, Wr)


def _reference(x_nchw, weight_oihw, bias, r):
    """Pure-JAX reference matching the PyTorch module (full f32 precision)."""
    conv = lax.conv_general_dilated(
        x_nchw, weight_oihw,
        window_strides=(1, 1),
        padding=((0, 0), (1, 1)),
        dimension_numbers=("NCHW", "OIHW", "NCHW"),
        precision=lax.Precision.HIGHEST,
    ) + bias[None, :, None, None]
    B, CoutR, H, W = conv.shape
    Cout = CoutR // r
    out = conv.reshape(B, r, Cout, H, W)
    out = jnp.transpose(out, (0, 2, 3, 4, 1))
    return out.reshape(B, Cout, H, W * r)


if __name__ == "__main__":
    key = jax.random.PRNGKey(0)
    k_x, k_w, k_b = jax.random.split(key, 3)

    B, Cin, H, W = 2, 4, 16, 16
    Cout, r = 4, 2
    CoutR = Cout * r

    x = jax.random.normal(k_x, (B, Cin, H, W), dtype=jnp.float32)
    # Deterministic parameter init (Kaiming-uniform-like scale).
    fan_in = Cin * KH * KW
    bound = 1.0 / (fan_in ** 0.5)
    weight = jax.random.uniform(k_w, (CoutR, Cin, KH, KW), jnp.float32,
                                minval=-bound, maxval=bound)
    bias = jax.random.uniform(k_b, (CoutR,), jnp.float32,
                              minval=-bound, maxval=bound)

    out = jax.block_until_ready(sp_conv_transpose2d(x, weight, bias, r))
    ref = jax.block_until_ready(_reference(x, weight, bias, r))

    assert out.shape == (B, Cout, H, W * r), out.shape
    max_err = float(jnp.max(jnp.abs(out - ref)))
    assert jnp.allclose(out, ref, rtol=1e-5, atol=1e-5), f"max err {max_err}"
    print("KERNEL_OK")
</pallas_src>

<mosaic_0001>
module attributes {stable_mosaic.version = 11 : i64} {
  func.func @_spconv_subpixel_kernel(%arg0: i32, %arg1: i32, %arg2: memref<1x4x128xf32, #tpu.memory_space<vmem>>, %arg3: memref<8x13xf32, #tpu.memory_space<vmem>>, %arg4: memref<256x256xbf16, #tpu.memory_space<vmem>>, %arg5: memref<1x4x256xf32, #tpu.memory_space<vmem>>) attributes {dimension_semantics = [#tpu.dimension_semantics<parallel>, #tpu.dimension_semantics<parallel>], iteration_bounds = array<i64: 2, 2>, scalar_prefetch = 0 : i64, scratch_operands = 0 : i64, tpu.core_type = #tpu.core_type<tc>, window_params = [{transform_indices = @transform_0, window_bounds = array<i64: 1, 4, 128>}, {pipeline_mode = #tpu.pipeline_mode<synchronous>, transform_indices = @transform_1, window_bounds = array<i64: 8, 13>}, {pipeline_mode = #tpu.pipeline_mode<synchronous>, transform_indices = @transform_2, window_bounds = array<i64: 256, 256>}, {transform_indices = @transform_3, window_bounds = array<i64: 1, 4, 256>}]} {
    %c0 = arith.constant 0 : index
    %c0_0 = arith.constant 0 : index
    %c0_1 = arith.constant 0 : index
    %0 = vector.load %arg2[%c0, %c0_0, %c0_1] : memref<1x4x128xf32, #tpu.memory_space<vmem>>, vector<1x4x128xf32>
    %1 = vector.shape_cast %0 : vector<1x4x128xf32> to vector<4x128xf32>
    %2 = tpu.iota {dimensions = array<i32: 1>} : vector<4x128xi32>
    %c16_i32 = arith.constant 16 : i32
    %c0_i32 = arith.constant 0 : i32
    %3 = arith.cmpi eq, %c16_i32, %c0_i32 : i32
    %c1_i32 = arith.constant 1 : i32
    %4 = arith.select %3, %c1_i32, %c16_i32 : i32
    %5 = vector.broadcast %4 : i32 to vector<4x128xi32>
    %6 = arith.remsi %2, %5 : vector<4x128xi32>
    %c0_i32_2 = arith.constant 0 : i32
    %7 = vector.broadcast %c0_i32_2 : i32 to vector<4x128xi32>
    %8 = arith.cmpi ne, %6, %7 : vector<4x128xi32>
    %c0_i32_3 = arith.constant 0 : i32
    %9 = vector.broadcast %c0_i32_3 : i32 to vector<4x128xi32>
    %10 = arith.cmpi slt, %6, %9 : vector<4x128xi32>
    %c0_i32_4 = arith.constant 0 : i32
    %11 = arith.cmpi slt, %4, %c0_i32_4 : i32
    %12 = vector.broadcast %11 : i1 to vector<4x128xi1>
    %13 = vector.broadcast %12 : vector<4x128xi1> to vector<4x128xi1>
    %14 = arith.xori %10, %13 : vector<4x128xi1>
    %15 = arith.andi %14, %8 : vector<4x128xi1>
    %16 = vector.broadcast %4 : i32 to vector<4x128xi32>
    %17 = arith.addi %6, %16 : vector<4x128xi32>
    %18 = arith.select %15, %17, %6 : vector<4x128xi1>, vector<4x128xi32>
    %c0_i32_5 = arith.constant 0 : i32
    %19 = vector.broadcast %c0_i32_5 : i32 to vector<4x128xi32>
    %20 = arith.cmpi eq, %18, %19 : vector<4x128xi32>
    %c1_i32_6 = arith.constant 1 : i32
    %21 = tpu.dynamic_rotate %1 by %c1_i32_6 dim 1 : vector<4x128xf32>, i32 -> vector<4x128xf32>
    %cst = arith.constant 0.000000e+00 : f32
    %22 = vector.broadcast %cst : f32 to vector<4x128xf32>
    %23 = arith.select %20, %22, %21 : vector<4x128xi1>, vector<4x128xf32>
    %c15_i32 = arith.constant 15 : i32
    %24 = vector.broadcast %c15_i32 : i32 to vector<4x128xi32>
    %25 = arith.cmpi eq, %18, %24 : vector<4x128xi32>
    %c127_i32 = arith.constant 127 : i32
    %26 = tpu.dynamic_rotate %1 by %c127_i32 dim 1 : vector<4x128xf32>, i32 -> vector<4x128xf32>
    %cst_7 = arith.constant 0.000000e+00 : f32
    %27 = vector.broadcast %cst_7 : f32 to vector<4x128xf32>
    %28 = arith.select %25, %27, %26 : vector<4x128xi1>, vector<4x128xf32>
    %c0_8 = arith.constant 0 : index
    %c0_9 = arith.constant 0 : index
    %29 = vector.load %arg3[%c0_8, %c0_9] : memref<8x13xf32, #tpu.memory_space<vmem>>, vector<8x13xf32>
    %cst_10 = arith.constant 0.000000e+00 : f32
    %30 = vector.broadcast %cst_10 : f32 to vector<8x128xf32>
    %31 = vector.extract_strided_slice %29 {offsets = [0, 12], sizes = [8, 1], strides = [1, 1]} : vector<8x13xf32> to vector<8x1xf32>
    %32 = vector.broadcast %31 : vector<8x1xf32> to vector<8x128xf32>
    %33 = arith.addf %30, %32 : vector<8x128xf32>
    %34 = vector.extract_strided_slice %29 {offsets = [0, 0], sizes = [8, 1], strides = [1, 1]} : vector<8x13xf32> to vector<8x1xf32>
    %35 = vector.extract_strided_slice %23 {offsets = [0, 0], sizes = [1, 128], strides = [1, 1]} : vector<4x128xf32> to vector<1x128xf32>
    %36 = vector.broadcast %34 : vector<8x1xf32> to vector<8x128xf32>
    %37 = vector.broadcast %35 : vector<1x128xf32> to vector<8x128xf32>
    %38 = arith.mulf %36, %37 : vector<8x128xf32>
    %39 = arith.addf %33, %38 : vector<8x128xf32>
    %40 = vector.extract_strided_slice %29 {offsets = [0, 1], sizes = [8, 1], strides = [1, 1]} : vector<8x13xf32> to vector<8x1xf32>
    %41 = vector.extract_strided_slice %1 {offsets = [0, 0], sizes = [1, 128], strides = [1, 1]} : vector<4x128xf32> to vector<1x128xf32>
    %42 = vector.broadcast %40 : vector<8x1xf32> to vector<8x128xf32>
    %43 = vector.broadcast %41 : vector<1x128xf32> to vector<8x128xf32>
    %44 = arith.mulf %42, %43 : vector<8x128xf32>
    %45 = arith.addf %39, %44 : vector<8x128xf32>
    %46 = vector.extract_strided_slice %29 {offsets = [0, 2], sizes = [8, 1], strides = [1, 1]} : vector<8x13xf32> to vector<8x1xf32>
    %47 = vector.extract_strided_slice %28 {offsets = [0, 0], sizes = [1, 128], strides = [1, 1]} : vector<4x128xf32> to vector<1x128xf32>
    %48 = vector.broadcast %46 : vector<8x1xf32> to vector<8x128xf32>
    %49 = vector.broadcast %47 : vector<1x128xf32> to vector<8x128xf32>
    %50 = arith.mulf %48, %49 : vector<8x128xf32>
    %51 = arith.addf %45, %50 : vector<8x128xf32>
    %52 = vector.extract_strided_slice %29 {offsets = [0, 3], sizes = [8, 1], strides = [1, 1]} : vector<8x13xf32> to vector<8x1xf32>
    %53 = vector.extract_strided_slice %23 {offsets = [1, 0], sizes = [1, 128], strides = [1, 1]} : vector<4x128xf32> to vector<1x128xf32>
    %54 = vector.broadcast %52 : vector<8x1xf32> to vector<8x128xf32>
    %55 = vector.broadcast %53 : vector<1x128xf32> to vector<8x128xf32>
    %56 = arith.mulf %54, %55 : vector<8x128xf32>
    %57 = arith.addf %51, %56 : vector<8x128xf32>
    %58 = vector.extract_strided_slice %29 {offsets = [0, 4], sizes = [8, 1], strides = [1, 1]} : vector<8x13xf32> to vector<8x1xf32>
    %59 = vector.extract_strided_slice %1 {offsets = [1, 0], sizes = [1, 128], strides = [1, 1]} : vector<4x128xf32> to vector<1x128xf32>
    %60 = vector.broadcast %58 : vector<8x1xf32> to vector<8x128xf32>
    %61 = vector.broadcast %59 : vector<1x128xf32> to vector<8x128xf32>
    %62 = arith.mulf %60, %61 : vector<8x128xf32>
    %63 = arith.addf %57, %62 : vector<8x128xf32>
    %64 = vector.extract_strided_slice %29 {offsets = [0, 5], sizes = [8, 1], strides = [1, 1]} : vector<8x13xf32> to vector<8x1xf32>
    %65 = vector.extract_strided_slice %28 {offsets = [1, 0], sizes = [1, 128], strides = [1, 1]} : vector<4x128xf32> to vector<1x128xf32>
    %66 = vector.broadcast %64 : vector<8x1xf32> to vector<8x128xf32>
    %67 = vector.broadcast %65 : vector<1x128xf32> to vector<8x128xf32>
    %68 = arith.mulf %66, %67 : vector<8x128xf32>
    %69 = arith.addf %63, %68 : vector<8x128xf32>
    %70 = vector.extract_strided_slice %29 {offsets = [0, 6], sizes = [8, 1], strides = [1, 1]} : vector<8x13xf32> to vector<8x1xf32>
    %71 = vector.extract_strided_slice %23 {offsets = [2, 0], sizes = [1, 128], strides = [1, 1]} : vector<4x128xf32> to vector<1x128xf32>
    %72 = vector.broadcast %70 : vector<8x1xf32> to vector<8x128xf32>
    %73 = vector.broadcast %71 : vector<1x128xf32> to vector<8x128xf32>
    %74 = arith.mulf %72, %73 : vector<8x128xf32>
    %75 = arith.addf %69, %74 : vector<8x128xf32>
    %76 = vector.extract_strided_slice %29 {offsets = [0, 7], sizes = [8, 1], strides = [1, 1]} : vector<8x13xf32> to vector<8x1xf32>
    %77 = vector.extract_strided_slice %1 {offsets = [2, 0], sizes = [1, 128], strides = [1, 1]} : vector<4x128xf32> to vector<1x128xf32>
    %78 = vector.broadcast %76 : vector<8x1xf32> to vector<8x128xf32>
    %79 = vector.broadcast %77 : vector<1x128xf32> to vector<8x128xf32>
    %80 = arith.mulf %78, %79 : vector<8x128xf32>
    %81 = arith.addf %75, %80 : vector<8x128xf32>
    %82 = vector.extract_strided_slice %29 {offsets = [0, 8], sizes = [8, 1], strides = [1, 1]} : vector<8x13xf32> to vector<8x1xf32>
    %83 = vector.extract_strided_slice %28 {offsets = [2, 0], sizes = [1, 128], strides = [1, 1]} : vector<4x128xf32> to vector<1x128xf32>
    %84 = vector.broadcast %82 : vector<8x1xf32> to vector<8x128xf32>
    %85 = vector.broadcast %83 : vector<1x128xf32> to vector<8x128xf32>
    %86 = arith.mulf %84, %85 : vector<8x128xf32>
    %87 = arith.addf %81, %86 : vector<8x128xf32>
    %88 = vector.extract_strided_slice %29 {offsets = [0, 9], sizes = [8, 1], strides = [1, 1]} : vector<8x13xf32> to vector<8x1xf32>
    %89 = vector.extract_strided_slice %23 {offsets = [3, 0], sizes = [1, 128], strides = [1, 1]} : vector<4x128xf32> to vector<1x128xf32>
    %90 = vector.broadcast %88 : vector<8x1xf32> to vector<8x128xf32>
    %91 = vector.broadcast %89 : vector<1x128xf32> to vector<8x128xf32>
    %92 = arith.mulf %90, %91 : vector<8x128xf32>
    %93 = arith.addf %87, %92 : vector<8x128xf32>
    %94 = vector.extract_strided_slice %29 {offsets = [0, 10], sizes = [8, 1], strides = [1, 1]} : vector<8x13xf32> to vector<8x1xf32>
    %95 = vector.extract_strided_slice %1 {offsets = [3, 0], sizes = [1, 128], strides = [1, 1]} : vector<4x128xf32> to vector<1x128xf32>
    %96 = vector.broadcast %94 : vector<8x1xf32> to vector<8x128xf32>
    %97 = vector.broadcast %95 : vector<1x128xf32> to vector<8x128xf32>
    %98 = arith.mulf %96, %97 : vector<8x128xf32>
    %99 = arith.addf %93, %98 : vector<8x128xf32>
    %100 = vector.extract_strided_slice %29 {offsets = [0, 11], sizes = [8, 1], strides = [1, 1]} : vector<8x13xf32> to vector<8x1xf32>
    %101 = vector.extract_strided_slice %28 {offsets = [3, 0], sizes = [1, 128], strides = [1, 1]} : vector<4x128xf32> to vector<1x128xf32>
    %102 = vector.broadcast %100 : vector<8x1xf32> to vector<8x128xf32>
    %103 = vector.broadcast %101 : vector<1x128xf32> to vector<8x128xf32>
    %104 = arith.mulf %102, %103 : vector<8x128xf32>
    %105 = arith.addf %99, %104 : vector<8x128xf32>
    %106 = vector.extract_strided_slice %105 {offsets = [0, 0], sizes = [4, 128], strides = [1, 1]} : vector<8x128xf32> to vector<4x128xf32>
    %107 = vector.extract_strided_slice %105 {offsets = [4, 0], sizes = [4, 128], strides = [1, 1]} : vector<8x128xf32> to vector<4x128xf32>
    %108 = tpu.concatenate %106, %107 in 1 : vector<4x128xf32>, vector<4x128xf32> -> vector<4x256xf32>
    %c0_11 = arith.constant 0 : index
    %c0_12 = arith.constant 0 : index
    %109 = vector.load %arg4[%c0_11, %c0_12] : memref<256x256xbf16, #tpu.memory_space<vmem>>, vector<256x256xbf16>
    %110 = arith.truncf %108 : vector<4x256xf32> to vector<4x256xbf16>
    %111 = arith.extf %110 : vector<4x256xbf16> to vector<4x256xf32>
    %112 = arith.subf %108, %111 : vector<4x256xf32>
    %113 = arith.truncf %112 : vector<4x256xf32> to vector<4x256xbf16>
    %114 = arith.extf %113 : vector<4x256xbf16> to vector<4x256xf32>
    %115 = arith.subf %112, %114 : vector<4x256xf32>
    %116 = arith.truncf %115 : vector<4x256xf32> to vector<4x256xbf16>
    %cst_13 = arith.constant dense<0.000000e+00> : vector<4x256xf32>
    %117 = tpu.matmul %110, %109, %cst_13 {dimension_numbers = #tpu.dot_dimension_numbers<[1], [0], [0], [1], [0, 0, 1, 1], [], []>} : vector<4x256xbf16>, vector<256x256xbf16>, vector<4x256xf32> -> vector<4x256xf32>
    %cst_14 = arith.constant dense<0.000000e+00> : vector<4x256xf32>
    %118 = tpu.matmul %113, %109, %cst_14 {dimension_numbers = #tpu.dot_dimension_numbers<[1], [0], [0], [1], [0, 0, 1, 1], [], []>} : vector<4x256xbf16>, vector<256x256xbf16>, vector<4x256xf32> -> vector<4x256xf32>
    %119 = arith.addf %117, %118 : vector<4x256xf32>
    %cst_15 = arith.constant dense<0.000000e+00> : vector<4x256xf32>
    %120 = tpu.matmul %116, %109, %cst_15 {dimension_numbers = #tpu.dot_dimension_numbers<[1], [0], [0], [1], [0, 0, 1, 1], [], []>} : vector<4x256xbf16>, vector<256x256xbf16>, vector<4x256xf32> -> vector<4x256xf32>
    %121 = arith.addf %119, %120 : vector<4x256xf32>
    %c0_16 = arith.constant 0 : index
    %c0_17 = arith.constant 0 : index
    %c0_18 = arith.constant 0 : index
    %122 = vector.load %arg5[%c0_16, %c0_17, %c0_18] : memref<1x4x256xf32, #tpu.memory_space<vmem>>, vector<1x4x256xf32>
    %123 = vector.shape_cast %122 : vector<1x4x256xf32> to vector<4x256xf32>
    %124 = vector.shape_cast %121 : vector<4x256xf32> to vector<1x4x256xf32>
    tpu.vector_store %arg5[%c0_16, %c0_17, %c0_18], %124 {strides = array<i32>} : memref<1x4x256xf32, #tpu.memory_space<vmem>>, vector<1x4x256xf32>,
    return
  }
  func.func @transform_0(%arg0: i32, %arg1: i32) -> (i32, i32, i32) {
    %c0_i32 = arith.constant 0 : i32
    %c0_i32_0 = arith.constant 0 : i32
    return %arg0, %c0_i32, %arg1 : i32, i32, i32
  }
  func.func @transform_1(%arg0: i32, %arg1: i32) -> (i32, i32) {
    %c0_i32 = arith.constant 0 : i32
    %c0_i32_0 = arith.constant 0 : i32
    %c0_i32_1 = arith.constant 0 : i32
    return %c0_i32, %c0_i32_0 : i32, i32
  }
  func.func @transform_2(%arg0: i32, %arg1: i32) -> (i32, i32) {
    %c0_i32 = arith.constant 0 : i32
    %c0_i32_0 = arith.constant 0 : i32
    %c0_i32_1 = arith.constant 0 : i32
    return %c0_i32, %c0_i32_0 : i32, i32
  }
  func.func @transform_3(%arg0: i32, %arg1: i32) -> (i32, i32, i32) {
    %c0_i32 = arith.constant 0 : i32
    %c0_i32_0 = arith.constant 0 : i32
    return %arg0, %c0_i32, %arg1 : i32, i32, i32
  }
}

</mosaic_0001>

<llo_original>
// kernel: tpu_custom_call.1
$region0: #{tpu_custom_call.1}
  #allocation0 [shape = 'u32[]', space=smem, size = 0x4, offset = 0x4, fixed_abs, tag = 'smem constant byte address 0x4 - core index']
  #allocation1 [shape = 'u32[144,128]{1,0:T(1,128)}', space=vmem, size = 0x12000, scoped, tag = 'internal scratch']
  %s0 = inlined_call_operand.hbm [shape: f32[2,4,256], index: 0, kind: input, shape index: {}]
  %s1 = inlined_call_operand.hbm [shape: f32[8,13], index: 1, kind: input, shape index: {}]
  %s2 = inlined_call_operand.hbm [shape: bf16[256,256], index: 2, kind: input, shape index: {}]
  %s3 = inlined_call_operand.hbm [shape: f32[2,4,512], index: 3, kind: output, shape index: {}]
  %s4 = sld [smem:[#allocation0]]
  $region57: #{tpu_custom_call.1} parent=0
    _
  %s6 = ssub.s32 1, %s4
  %s7 = scalar_select 0, %s6, %s4
  $region1: #{tpu_custom_call.1} parent=0
    #allocation2 [shape = 'u8[4096]{0}', space=vmem, size = 0x1000, scoped, tag = 'input window, operand 0']
    #allocation3 [shape = 's32[2]{0}', space=sflag, size = 0x8, scoped, tag = 'scoped memory for tpu_custom_call.1']
    #allocation4 [shape = 's32[2]{0}', space=sflag, size = 0x8, scoped, tag = 'scoped memory for tpu_custom_call.1']
    #allocation5 [shape = 'u8[4096]{0}', space=vmem, size = 0x1000, scoped, tag = 'input window, operand 1, single buffered']
    #allocation6 [shape = 's32[1]{0}', space=sflag, size = 0x4, scoped, tag = 'scoped memory for tpu_custom_call.1']
    #allocation7 [shape = 'u8[131072]{0}', space=vmem, size = 0x20000, scoped, tag = 'input window, operand 2, single buffered']
    #allocation8 [shape = 'u8[8192]{0}', space=vmem, size = 0x2000, scoped, tag = 'output window, operand 0']
    %8 = vsyncpa [#allocation3], 0
    %s9 = scalar_lea.sflag [#allocation3], 1
    %10 = vsyncpa %s9, 0
    %11 = vsyncpa [#allocation6], 0
    %12 = vsyncpa [#allocation4], 0
    %s13 = scalar_lea.sflag [#allocation4], 1
    %14 = vsyncpa %s13, 0
    loop: start=0, step=1, limit=6
    $region2: #{tpu_custom_call.1} parent=1 // loop_pre_header
      _
    $region3: #{tpu_custom_call.1} parent=1 // loop_header
      %s16 = sphi 0, %s20
      %p17 = scmp.ge.s32.totalorder %s16, 6
      %s23 = sphi 0, %s35
      %s24 = sphi 0, %s31
      %s25 = sphi 0, %s23
      %s26 = sphi 0, %s24
      %s27 = sphi 0, %s25
      %s28 = sphi 0, %s26
      %s40 = sphi 0, %s42
      %s43 = sphi 0, %s40
      %s44 = sphi 0, %s43
      %s60 = sphi 0, %s44
      %s64 = sphi 0, %s64
      %s66 = sphi 0, %s64
      %s67 = sphi 0, %s66
      %s81 = sphi 0, %s67
      %s85 = sphi 0, %s85
      %s87 = sphi 0, %s85
      %s88 = sphi 0, %s87
      %s102 = sphi 0, %s88
      %s110 = sphi 0, %s112
      %s113 = sphi 0, %s110
      %s114 = sphi 0, %s113
      %s130 = sphi 0, %s114
    $region4: #{tpu_custom_call.1} parent=1 // loop_header_branch
      %19 = sbr.rel (%p17) target = $region8
    $region5: #{tpu_custom_call.1} parent=1 // loop_body
      %s21 = ssub.s32 %s16, 1
      %s22 = ssub.s32 %s16, 2
      %s29 = sadd.s32 1, %s24
      %p30 = scmp.ge.s32.totalorder %s29, 2
      %s31 = scalar_select %p30, 0, %s29
      %s32 = sadd.s32 1, %s23
      %s33 = scalar_select %p30, %s32, %s23
      %p34 = scmp.ge.s32.totalorder %s33, 2
      %s35 = scalar_select %p34, 0, %s33
      %s36 = ssub.s32 %s23, %s35
      %s37 = ssub.s32 %s24, %s31
      %s38 = sor.u32 %s36, %s37
      %p39 = scmp.eq.s32.totalorder %s38, 0
      %s41 = sadd.s32 %s40, 1
      %s42 = scalar_select %p39, %s40, %s41
      %p45 = pneg %p39
      %p46 = scmp.eq.s32.totalorder %s16, 3
      %p47 = por %p45, %p46
      %p48 = scmp.ne.s32.totalorder %s40, %s43
      %p49 = scmp.eq.s32.totalorder %s16, 0
      %p50 = por %p48, %p49
      %p51 = scmp.ne.s32.totalorder %s40, %s43
      %p52 = scmp.eq.s32.totalorder %s21, 3
      %p53 = por %p51, %p52
      %p54 = scmp.ne.s32.totalorder %s43, %s44
      %p55 = scmp.eq.s32.totalorder %s21, 0
      %p56 = por %p54, %p55
      %p57 = scmp.ne.s32.totalorder %s43, %s44
      %p58 = scmp.eq.s32.totalorder %s22, 3
      %p59 = por %p57, %p58
      %p61 = scmp.ne.s32.totalorder %s44, %s60
      %p62 = scmp.eq.s32.totalorder %s22, 0
      %p63 = por %p61, %p62
      %s65 = sadd.s32 %s64, 1
      %p68 = scmp.eq.s32.totalorder %s16, 3
      %p69 = scmp.ne.s32.totalorder %s64, %s66
      %p70 = scmp.eq.s32.totalorder %s16, 0
      %p71 = por %p69, %p70
      %p72 = scmp.ne.s32.totalorder %s64, %s66
      %p73 = scmp.eq.s32.totalorder %s21, 3
      %p74 = por %p72, %p73
      %p75 = scmp.ne.s32.totalorder %s66, %s67
      %p76 = scmp.eq.s32.totalorder %s21, 0
      %p77 = por %p75, %p76
      %p78 = scmp.ne.s32.totalorder %s66, %s67
      %p79 = scmp.eq.s32.totalorder %s22, 3
      %p80 = por %p78, %p79
      %p82 = scmp.ne.s32.totalorder %s67, %s81
      %p83 = scmp.eq.s32.totalorder %s22, 0
      %p84 = por %p82, %p83
      %s86 = sadd.s32 %s85, 1
      %p89 = scmp.eq.s32.totalorder %s16, 3
      %p90 = scmp.ne.s32.totalorder %s85, %s87
      %p91 = scmp.eq.s32.totalorder %s16, 0
      %p92 = por %p90, %p91
      %p93 = scmp.ne.s32.totalorder %s85, %s87
      %p94 = scmp.eq.s32.totalorder %s21, 3
      %p95 = por %p93, %p94
      %p96 = scmp.ne.s32.totalorder %s87, %s88
      %p97 = scmp.eq.s32.totalorder %s21, 0
      %p98 = por %p96, %p97
      %p99 = scmp.ne.s32.totalorder %s87, %s88
      %p100 = scmp.eq.s32.totalorder %s22, 3
      %p101 = por %p99, %p100
      %p103 = scmp.ne.s32.totalorder %s88, %s102
      %p104 = scmp.eq.s32.totalorder %s22, 0
      %p105 = por %p103, %p104
      %s106 = ssub.s32 %s23, %s35
      %s107 = ssub.s32 %s24, %s31
      %s108 = sor.u32 %s106, %s107
      %p109 = scmp.eq.s32.totalorder %s108, 0
      %s111 = sadd.s32 %s110, 1
      %s112 = scalar_select %p109, %s110, %s111
      %p115 = pneg %p109
      %p116 = scmp.eq.s32.totalorder %s16, 3
      %p117 = por %p115, %p116
      %p118 = scmp.ne.s32.totalorder %s110, %s113
      %p119 = scmp.eq.s32.totalorder %s16, 0
      %p120 = por %p118, %p119
      %p121 = scmp.ne.s32.totalorder %s110, %s113
      %p122 = scmp.eq.s32.totalorder %s21, 3
      %p123 = por %p121, %p122
      %p124 = scmp.ne.s32.totalorder %s113, %s114
      %p125 = scmp.eq.s32.totalorder %s21, 0
      %p126 = por %p124, %p125
      %p127 = scmp.ne.s32.totalorder %s113, %s114
      %p128 = scmp.eq.s32.totalorder %s22, 3
      %p129 = por %p127, %p128
      %p131 = scmp.ne.s32.totalorder %s114, %s130
      %p132 = scmp.eq.s32.totalorder %s22, 0
      %p133 = por %p131, %p132
      %p134 = scmp.le.s32.totalorder 1, %s16
      %p135 = scmp.lt.s32.totalorder %s16, 5
      %p136 = pnand %p134, %p135
      %p137 = pneg %p136
      // Predicated region
      $region9: #{tpu_custom_call.1} parent=5 // pred_check
        _
      $region10: #{tpu_custom_call.1} parent=5 // pred_check_branch
        %139 = sbr.rel (%p136) target = $region12
      $region11: #{tpu_custom_call.1} parent=5 // pred_region
        %s140 = ssub.s32 %s16, 1
        // Predicated region
        $region13: #{tpu_custom_call.1} parent=11 // pred_check
          %p141 = pneg %p77
        $region14: #{tpu_custom_call.1} parent=11 // pred_check_branch
          %143 = sbr.rel (%p141) target = $region16
        $region15: #{tpu_custom_call.1} parent=11 // pred_region
          %s145 = ssub.s32 128, 128
          %146 = vsyncadd [#allocation6], %s145
          %s148 = sshll.u32 [#allocation5], 4
          %s149 = int_to_ptr.vmem [resolvable:$true] %s148
          %151 = dma.hbm_to_vmem [thread:$0]  %s1, 128, %s149, [#allocation6]
        $region16: #{tpu_custom_call.1} parent=11 // pred_fallthru
          _
        // Predicated region
        $region17: #{tpu_custom_call.1} parent=11 // pred_check
          %p152 = pneg %p98
        $region18: #{tpu_custom_call.1} parent=11 // pred_check_branch
          %154 = sbr.rel (%p152) target = $region20
        $region19: #{tpu_custom_call.1} parent=11 // pred_region
          %s156 = ssub.s32 4096, 4096
          %157 = vsyncadd [#allocation6], %s156
          %s158 = sshll.u32 [#allocation7], 4
          %s159 = int_to_ptr.vmem [resolvable:$true] %s158
          %164 = dma.hbm_to_vmem [thread:$0]  %s2, 4096, %s159, [#allocation6], 128, 128, 8
        $region20: #{tpu_custom_call.1} parent=11 // pred_fallthru
          _
      $region12: #{tpu_custom_call.1} parent=5 // pred_fallthru
        _
      %p165 = scmp.lt.s32.totalorder %s16, 4
      // Predicated region
      $region21: #{tpu_custom_call.1} parent=5 // pred_check
        %p166 = pneg %p165
      $region22: #{tpu_custom_call.1} parent=5 // pred_check_branch
        %168 = sbr.rel (%p166) target = $region24
      $region23: #{tpu_custom_call.1} parent=5 // pred_region
        // Predicated region
        $region25: #{tpu_custom_call.1} parent=23 // pred_check
          %p169 = pneg %p50
        $region26: #{tpu_custom_call.1} parent=23 // pred_check_branch
          %171 = sbr.rel (%p169) target = $region28
        $region27: #{tpu_custom_call.1} parent=23 // pred_region
          %s172 = sand.u32 %s40, 1
          %s173 = scalar_lea.sflag [#allocation3], %s172
          %s174 = sand.u32 %s40, 1
          %s175 = smul.addr %s174, 4
          %s176 = scalar_lea.vmem [#allocation2], %s175
          %s178 = ssub.s32 64, 64
          %179 = vsyncadd %s173, %s178
          %s180 = smul.addr %s23, 2
          %s181 = sadd.s32 %s24, %s180
          %s182 = smul.addr %s181, 64
          %s183 = scalar_lea.hbm %s0, %s182
          %s185 = sshll.u32 %s176, 4
          %s186 = int_to_ptr.vmem [resolvable:$true] %s185
          %188 = dma.hbm_to_vmem [thread:$0]  %s183, 64, %s186, %s173
        $region28: #{tpu_custom_call.1} parent=23 // pred_fallthru
          _
      $region24: #{tpu_custom_call.1} parent=5 // pred_fallthru
        _
      %p189 = scmp.le.s32.totalorder 1, %s16
      %p190 = scmp.lt.s32.totalorder %s16, 5
      %p191 = pnand %p189, %p190
      %p192 = pneg %p191
      // Predicated region
      $region29: #{tpu_custom_call.1} parent=5 // pred_check
        _
      $region30: #{tpu_custom_call.1} parent=5 // pred_check_branch
        %194 = sbr.rel (%p191) target = $region32
      $region31: #{tpu_custom_call.1} parent=5 // pred_region
        %s195 = ssub.s32 %s16, 1
        %s196 = sand.u32 %s43, 1
        %s197 = scalar_lea.sflag [#allocation3], %s196
        %s198 = sand.u32 %s43, 1
        %s199 = smul.addr %s198, 4
        %s200 = scalar_lea.vmem [#allocation2], %s199
        // Predicated region
        $region33: #{tpu_custom_call.1} parent=31 // pred_check
          %p201 = pneg %p56
        $region34: #{tpu_custom_call.1} parent=31 // pred_check_branch
          %203 = sbr.rel (%p201) target = $region36
        $region35: #{tpu_custom_call.1} parent=31 // pred_region
          %204 = dma.done %s197, 64
        $region36: #{tpu_custom_call.1} parent=31 // pred_fallthru
          _
        // Predicated region
        $region37: #{tpu_custom_call.1} parent=31 // pred_check
          %p205 = pneg %p77
        $region38: #{tpu_custom_call.1} parent=31 // pred_check_branch
          %207 = sbr.rel (%p205) target = $region40
        $region39: #{tpu_custom_call.1} parent=31 // pred_region
          %208 = dma.done [#allocation6], 128
        $region40: #{tpu_custom_call.1} parent=31 // pred_fallthru
          _
        // Predicated region
        $region41: #{tpu_custom_call.1} parent=31 // pred_check
          %p209 = pneg %p98
        $region42: #{tpu_custom_call.1} parent=31 // pred_check_branch
          %211 = sbr.rel (%p209) target = $region44
        $region43: #{tpu_custom_call.1} parent=31 // pred_region
          %212 = dma.done [#allocation6], 4096
        $region44: #{tpu_custom_call.1} parent=31 // pred_fallthru
          _
        %s213 = sand.u32 %s43, 1
        %s214 = scalar_lea.sflag [#allocation3], %s213
        %s215 = sand.u32 %s43, 1
        %s216 = smul.addr %s215, 4
        %s217 = scalar_lea.vmem [#allocation2], %s216
        %p218 = pneg %p56
        %p219 = pneg %p53
        %p220 = pneg %p77
        %p221 = pneg %p74
        %p222 = pneg %p98
        %p223 = pneg %p95
        %p224 = pneg %p126
        %p225 = pneg %p123
        %s226 = sand.u32 %s113, 1
        %s227 = scalar_lea.sflag [#allocation4], %s226
        %s228 = sand.u32 %s113, 1
        %s229 = smul.addr %s228, 8
        %s230 = scalar_lea.vmem [#allocation8], %s229
        %s231 = smul.u32 2, %s26
        %v232 = vld [vmem:[%s200] sm:$0xf]
        %v233 = vlaneseq
        %v234 = vand.u32 %v233, 127
        %vm235 = vcmp.lt.s32.totalorder %v234, 0
        %v236 = vsub.s32 0, %v234
        %v237 = vsel %vm235, %v236, %v234
        %v238 = vshrl.u32 %v237, 4
        %v239 = vand.u32 %v237, 15
        %v240 = vsub.s32 0, %v239
        %v241 = vsel %vm235, %v240, %v239
        %vm242 = vcmp.ne.s32.totalorder %v241, 0
        %vm243 = vcmp.lt.s32.totalorder %v241, 0
        %vm244 = vmand %vm243, %vm242
        %v245 = vadd.s32 %v241, 16
        %v246 = vsel %vm244, %v245, %v241
        %vm247 = vcmp.eq.s32.totalorder %v246, 0
        %248 = vrot.lane.b32.xlu0 %v232, 1
        %v249 = vpop.permute.xlu0 %248
        %v250 = vsel %vm247, 0.0, %v249
        %vm251 = vcmp.eq.s32.totalorder %v246, 15
        %252 = vrot.lane.b32.xlu0 %v232, 127
        %v253 = vpop.permute.xlu0 %252
        %v254 = vsel %vm251, 0.0, %v253
        %v255 = vld [vmem:[#allocation5] sm:$0xff]
        %257 = vset.pattern.permute.xlu0 12
        %258 = vperm.xlu0 %257, %v255
        %v259 = vpop.permute.xlu0 %258
        %v261 = vadd.f32 %v259, 0.0
        %262 = vset.pattern.permute.xlu0 0
        %263 = vperm.xlu0 %262, %v255
        %v264 = vpop.permute.xlu0 %263
        %v266 = vlaneseq
        %v267 = vshrl.u32 %v266, 7
        %v268 = vsub.s32 0, %v267
        %v269 = vrot.slane %v250, %v268
        %v270 = vmul.f32 %v264, %v269
        %v271 = vadd.f32 %v261, %v270
        %272 = vset.pattern.permute.xlu0 1
        %273 = vperm.xlu0 %272, %v255
        %v274 = vpop.permute.xlu0 %273
        %v276 = vlaneseq
        %v277 = vshrl.u32 %v276, 7
        %v278 = vsub.s32 0, %v277
        %v279 = vrot.slane %v232, %v278
        %v280 = vmul.f32 %v274, %v279
        %v281 = vadd.f32 %v271, %v280
        %282 = vset.pattern.permute.xlu0 2
        %283 = vperm.xlu0 %282, %v255
        %v284 = vpop.permute.xlu0 %283
        %v286 = vlaneseq
        %v287 = vshrl.u32 %v286, 7
        %v288 = vsub.s32 0, %v287
        %v289 = vrot.slane %v254, %v288
        %v290 = vmul.f32 %v284, %v289
        %v291 = vadd.f32 %v281, %v290
        %292 = vset.pattern.permute.xlu0 3
        %293 = vperm.xlu0 %292, %v255
        %v294 = vpop.permute.xlu0 %293
        %v296 = vlaneseq
        %v297 = vshrl.u32 %v296, 7
        %v298 = vsub.s32 1, %v297
        %v299 = vrot.slane %v250, %v298
        %v300 = vmul.f32 %v294, %v299
        %v301 = vadd.f32 %v291, %v300
        %302 = vset.pattern.permute.xlu0 4
        %303 = vperm.xlu0 %302, %v255
        %v304 = vpop.permute.xlu0 %303
        %v306 = vlaneseq
        %v307 = vshrl.u32 %v306, 7
        %v308 = vsub.s32 1, %v307
        %v309 = vrot.slane %v232, %v308
        %v310 = vmul.f32 %v304, %v309
        %v311 = vadd.f32 %v301, %v310
        %312 = vset.pattern.permute.xlu0 5
        %313 = vperm.xlu0 %312, %v255
        %v314 = vpop.permute.xlu0 %313
        %v316 = vlaneseq
        %v317 = vshrl.u32 %v316, 7
        %v318 = vsub.s32 1, %v317
        %v319 = vrot.slane %v254, %v318
        %v320 = vmul.f32 %v314, %v319
        %v321 = vadd.f32 %v311, %v320
        %322 = vset.pattern.permute.xlu0 6
        %323 = vperm.xlu0 %322, %v255
        %v324 = vpop.permute.xlu0 %323
        %v326 = vlaneseq
        %v327 = vshrl.u32 %v326, 7
        %v328 = vsub.s32 2, %v327
        %v329 = vrot.slane %v250, %v328
        %v330 = vmul.f32 %v324, %v329
        %v331 = vadd.f32 %v321, %v330
        %332 = vset.pattern.permute.xlu0 7
        %333 = vperm.xlu0 %332, %v255
        %v334 = vpop.permute.xlu0 %333
        %v336 = vlaneseq
        %v337 = vshrl.u32 %v336, 7
        %v338 = vsub.s32 2, %v337
        %v339 = vrot.slane %v232, %v338
        %v340 = vmul.f32 %v334, %v339
        %v341 = vadd.f32 %v331, %v340
        %342 = vset.pattern.permute.xlu0 8
        %343 = vperm.xlu0 %342, %v255
        %v344 = vpop.permute.xlu0 %343
        %v346 = vlaneseq
        %v347 = vshrl.u32 %v346, 7
        %v348 = vsub.s32 2, %v347
        %v349 = vrot.slane %v254, %v348
        %v350 = vmul.f32 %v344, %v349
        %v351 = vadd.f32 %v341, %v350
        %352 = vset.pattern.permute.xlu0 9
        %353 = vperm.xlu0 %352, %v255
        %v354 = vpop.permute.xlu0 %353
        %v356 = vlaneseq
        %v357 = vshrl.u32 %v356, 7
        %v358 = vsub.s32 3, %v357
        %v359 = vrot.slane %v250, %v358
        %v360 = vmul.f32 %v354, %v359
        %v361 = vadd.f32 %v351, %v360
        %362 = vset.pattern.permute.xlu0 10
        %363 = vperm.xlu0 %362, %v255
        %v364 = vpop.permute.xlu0 %363
        %v366 = vlaneseq
        %v367 = vshrl.u32 %v366, 7
        %v368 = vsub.s32 3, %v367
        %v369 = vrot.slane %v232, %v368
        %v370 = vmul.f32 %v364, %v369
        %v371 = vadd.f32 %v361, %v370
        %372 = vset.pattern.permute.xlu0 11
        %373 = vperm.xlu0 %372, %v255
        %v374 = vpop.permute.xlu0 %373
        %v376 = vlaneseq
        %v377 = vshrl.u32 %v376, 7
        %v378 = vsub.s32 3, %v377
        %v379 = vrot.slane %v254, %v378
        %v380 = vmul.f32 %v374, %v379
        %v381 = vadd.f32 %v371, %v380
        %v383 = vrot.slane %v381, 4
        %v385 = vld [vmem:[#allocation7] sm:$0xff]
        %v386 = vld [vmem:[#allocation7 + $0x8] sm:$0xff]
        %v387 = vld [vmem:[#allocation7 + $0x10] sm:$0xff]
        %v388 = vld [vmem:[#allocation7 + $0x18] sm:$0xff]
        %v389 = vld [vmem:[#allocation7 + $0x20] sm:$0xff]
        %v390 = vld [vmem:[#allocation7 + $0x28] sm:$0xff]
        %v391 = vld [vmem:[#allocation7 + $0x30] sm:$0xff]
        %v392 = vld [vmem:[#allocation7 + $0x38] sm:$0xff]
        %v393 = vld [vmem:[#allocation7 + $0x40] sm:$0xff]
        %v394 = vld [vmem:[#allocation7 + $0x48] sm:$0xff]
        %v395 = vld [vmem:[#allocation7 + $0x50] sm:$0xff]
        %v396 = vld [vmem:[#allocation7 + $0x58] sm:$0xff]
        %v397 = vld [vmem:[#allocation7 + $0x60] sm:$0xff]
        %v398 = vld [vmem:[#allocation7 + $0x68] sm:$0xff]
        %v399 = vld [vmem:[#allocation7 + $0x70] sm:$0xff]
        %v400 = vld [vmem:[#allocation7 + $0x78] sm:$0xff]
        %v401 = vld [vmem:[#allocation7 + $0x80] sm:$0xff]
        %v402 = vld [vmem:[#allocation7 + $0x88] sm:$0xff]
        %v403 = vld [vmem:[#allocation7 + $0x90] sm:$0xff]
        %v404 = vld [vmem:[#allocation7 + $0x98] sm:$0xff]
        %v405 = vld [vmem:[#allocation7 + $0xa0] sm:$0xff]
        %v406 = vld [vmem:[#allocation7 + $0xa8] sm:$0xff]
        %v407 = vld [vmem:[#allocation7 + $0xb0] sm:$0xff]
        %v408 = vld [vmem:[#allocation7 + $0xb8] sm:$0xff]
        %v409 = vld [vmem:[#allocation7 + $0xc0] sm:$0xff]
        %v410 = vld [vmem:[#allocation7 + $0xc8] sm:$0xff]
        %v411 = vld [vmem:[#allocation7 + $0xd0] sm:$0xff]
        %v412 = vld [vmem:[#allocation7 + $0xd8] sm:$0xff]
        %v413 = vld [vmem:[#allocation7 + $0xe0] sm:$0xff]
        %v414 = vld [vmem:[#allocation7 + $0xe8] sm:$0xff]
        %v415 = vld [vmem:[#allocation7 + $0xf0] sm:$0xff]
        %v416 = vld [vmem:[#allocation7 + $0xf8] sm:$0xff]
        %v417 = vpack.c.bf16 %v381, %v381
        %v418 = vpack.c.bf16 %v383, %v383
        %v419 = vunpack.c.l.bf16 %v417
        %v420 = vunpack.c.l.bf16 %v418
        %v421 = vsub.f32 %v381, %v419
        %v422 = vsub.f32 %v383, %v420
        %v423 = vpack.c.bf16 %v421, %v421
        %v424 = vpack.c.bf16 %v422, %v422
        %v425 = vunpack.c.l.bf16 %v423
        %v426 = vunpack.c.l.bf16 %v424
        %v427 = vsub.f32 %v421, %v425
        %v428 = vsub.f32 %v422, %v426
        %v429 = vpack.c.bf16 %v427, %v427
        %v430 = vpack.c.bf16 %v428, %v428
        %v463 = vunpack.c.l.b16 %v385
        %v464 = vunpack.c.h.b16 %v385
        %v465 = vunpack.c.l.b16 %v386
        %v466 = vunpack.c.h.b16 %v386
        %v467 = vunpack.c.l.b16 %v387
        %v468 = vunpack.c.h.b16 %v387
        %v469 = vunpack.c.l.b16 %v388
        %v470 = vunpack.c.h.b16 %v388
        %v471 = vunpack.c.l.b16 %v389
        %v472 = vunpack.c.h.b16 %v389
        %v473 = vunpack.c.l.b16 %v390
        %v474 = vunpack.c.h.b16 %v390
        %v475 = vunpack.c.l.b16 %v391
        %v476 = vunpack.c.h.b16 %v391
        %v477 = vunpack.c.l.b16 %v392
        %v478 = vunpack.c.h.b16 %v392
        %v479 = vunpack.c.l.b16 %v393
        %v480 = vunpack.c.h.b16 %v393
        %v481 = vunpack.c.l.b16 %v394
        %v482 = vunpack.c.h.b16 %v394
        %v483 = vunpack.c.l.b16 %v395
        %v484 = vunpack.c.h.b16 %v395
        %v485 = vunpack.c.l.b16 %v396
        %v486 = vunpack.c.h.b16 %v396
        %v487 = vunpack.c.l.b16 %v397
        %v488 = vunpack.c.h.b16 %v397
        %v489 = vunpack.c.l.b16 %v398
        %v490 = vunpack.c.h.b16 %v398
        %v491 = vunpack.c.l.b16 %v399
        %v492 = vunpack.c.h.b16 %v399
        %v493 = vunpack.c.l.b16 %v400
        %v494 = vunpack.c.h.b16 %v400
        %v495 = vunpack.c.l.b16 %v401
        %v496 = vunpack.c.h.b16 %v401
        %v497 = vunpack.c.l.b16 %v402
        %v498 = vunpack.c.h.b16 %v402
        %v499 = vunpack.c.l.b16 %v403
        %v500 = vunpack.c.h.b16 %v403
        %v501 = vunpack.c.l.b16 %v404
        %v502 = vunpack.c.h.b16 %v404
        %v503 = vunpack.c.l.b16 %v405
        %v504 = vunpack.c.h.b16 %v405
        %v505 = vunpack.c.l.b16 %v406
        %v506 = vunpack.c.h.b16 %v406
        %v507 = vunpack.c.l.b16 %v407
        %v508 = vunpack.c.h.b16 %v407
        %v509 = vunpack.c.l.b16 %v408
        %v510 = vunpack.c.h.b16 %v408
        %v511 = vunpack.c.l.b16 %v409
        %v512 = vunpack.c.h.b16 %v409
        %v513 = vunpack.c.l.b16 %v410
        %v514 = vunpack.c.h.b16 %v410
        %v515 = vunpack.c.l.b16 %v411
        %v516 = vunpack.c.h.b16 %v411
        %v517 = vunpack.c.l.b16 %v412
        %v518 = vunpack.c.h.b16 %v412
        %v519 = vunpack.c.l.b16 %v413
        %v520 = vunpack.c.h.b16 %v413
        %v521 = vunpack.c.l.b16 %v414
        %v522 = vunpack.c.h.b16 %v414
        %v523 = vunpack.c.l.b16 %v415
        %v524 = vunpack.c.h.b16 %v415
        %v525 = vunpack.c.l.b16 %v416
        %v526 = vunpack.c.h.b16 %v416
        %v527 = vpack.c.b16 %v465, %v463
        %v528 = vpack.c.b16 %v466, %v464
        %v529 = vpack.c.b16 %v469, %v467
        %v530 = vpack.c.b16 %v470, %v468
        %v531 = vpack.c.b16 %v473, %v471
        %v532 = vpack.c.b16 %v474, %v472
        %v533 = vpack.c.b16 %v477, %v475
        %v534 = vpack.c.b16 %v478, %v476
        %v535 = vpack.c.b16 %v481, %v479
        %v536 = vpack.c.b16 %v482, %v480
        %v537 = vpack.c.b16 %v485, %v483
        %v538 = vpack.c.b16 %v486, %v484
        %v539 = vpack.c.b16 %v489, %v487
        %v540 = vpack.c.b16 %v490, %v488
        %v541 = vpack.c.b16 %v493, %v491
        %v542 = vpack.c.b16 %v494, %v492
        %v543 = vpack.c.b16 %v497, %v495
        %v544 = vpack.c.b16 %v498, %v496
        %v545 = vpack.c.b16 %v501, %v499
        %v546 = vpack.c.b16 %v502, %v500
        %v547 = vpack.c.b16 %v505, %v503
        %v548 = vpack.c.b16 %v506, %v504
        %v549 = vpack.c.b16 %v509, %v507
        %v550 = vpack.c.b16 %v510, %v508
        %v551 = vpack.c.b16 %v513, %v511
        %v552 = vpack.c.b16 %v514, %v512
        %v553 = vpack.c.b16 %v517, %v515
        %v554 = vpack.c.b16 %v518, %v516
        %v555 = vpack.c.b16 %v521, %v519
        %v556 = vpack.c.b16 %v522, %v520
        %v557 = vpack.c.b16 %v525, %v523
        %v558 = vpack.c.b16 %v526, %v524
        %591 = vmatprep.subr.bf16.mxu0 %v528
        %592 = vmatpush1.bf16.msra.mxu0 %v527
        %593 = vmatprep.subr.bf16.mxu0 %v530
        %594 = vmatpush1.bf16.msra.mxu0 %v529
        %595 = vmatprep.subr.bf16.mxu0 %v532
        %596 = vmatpush1.bf16.msra.mxu0 %v531
        %597 = vmatprep.subr.bf16.mxu0 %v534
        %598 = vmatpush1.bf16.msra.mxu0 %v533
        %599 = vmatprep.subr.bf16.mxu0 %v536
        %600 = vmatpush1.bf16.msra.mxu0 %v535
        %601 = vmatprep.subr.bf16.mxu0 %v538
        %602 = vmatpush1.bf16.msra.mxu0 %v537
        %603 = vmatprep.subr.bf16.mxu0 %v540
        %604 = vmatpush1.bf16.msra.mxu0 %v539
        %605 = vmatprep.subr.bf16.mxu0 %v542
        %606 = vmatpush1.bf16.msra.mxu0 %v541
        %607 = vmatprep.subr.bf16.mxu0 %v544
        %608 = vmatpush1.bf16.msra.mxu0 %v543
        %609 = vmatprep.subr.bf16.mxu0 %v546
        %610 = vmatpush1.bf16.msra.mxu0 %v545
        %611 = vmatprep.subr.bf16.mxu0 %v548
        %612 = vmatpush1.bf16.msra.mxu0 %v547
        %613 = vmatprep.subr.bf16.mxu0 %v550
        %614 = vmatpush1.bf16.msra.mxu0 %v549
        %615 = vmatprep.subr.bf16.mxu0 %v552
        %616 = vmatpush1.bf16.msra.mxu0 %v551
        %617 = vmatprep.subr.bf16.mxu0 %v554
        %618 = vmatpush1.bf16.msra.mxu0 %v553
        %619 = vmatprep.subr.bf16.mxu0 %v556
        %620 = vmatpush1.bf16.msra.mxu0 %v555
        %621 = vmatprep.subr.bf16.mxu0 %v558
        %622 = vmatpush1.bf16.msra.mxu0 %v557
        %623 = vmatprep.mubr.bf16.mxu0 %v424
        %624 = vmatmul.mubr.bf16.gmra.mrb[0].mxu0 %v423
        %v625 = vpop.f32.mrb[0].mxu0
        %v626 = vadd.f32 0.0, %v625
        %v627 = vpop.f32.mrb[0].mxu0
        %v628 = vadd.f32 0.0, %v627
        %v629 = vpop.f32.mrb[0].mxu0
        %v630 = vpop.f32.mrb[0].mxu0
        %631 = vdwg.mxu0
        %632 = vmatprep.subr.bf16.mxu0 %v528
        %633 = vmatpush1.bf16.msra.mxu0 %v527
        %634 = vmatprep.subr.bf16.mxu0 %v530
        %635 = vmatpush1.bf16.msra.mxu0 %v529
        %636 = vmatprep.subr.bf16.mxu0 %v532
        %637 = vmatpush1.bf16.msra.mxu0 %v531
        %638 = vmatprep.subr.bf16.mxu0 %v534
        %639 = vmatpush1.bf16.msra.mxu0 %v533
        %640 = vmatprep.subr.bf16.mxu0 %v536
        %641 = vmatpush1.bf16.msra.mxu0 %v535
        %642 = vmatprep.subr.bf16.mxu0 %v538
        %643 = vmatpush1.bf16.msra.mxu0 %v537
        %644 = vmatprep.subr.bf16.mxu0 %v540
        %645 = vmatpush1.bf16.msra.mxu0 %v539
        %646 = vmatprep.subr.bf16.mxu0 %v542
        %647 = vmatpush1.bf16.msra.mxu0 %v541
        %648 = vmatprep.subr.bf16.mxu0 %v544
        %649 = vmatpush1.bf16.msra.mxu0 %v543
        %650 = vmatprep.subr.bf16.mxu0 %v546
        %651 = vmatpush1.bf16.msra.mxu0 %v545
        %652 = vmatprep.subr.bf16.mxu0 %v548
        %653 = vmatpush1.bf16.msra.mxu0 %v547
        %654 = vmatprep.subr.bf16.mxu0 %v550
        %655 = vmatpush1.bf16.msra.mxu0 %v549
        %656 = vmatprep.subr.bf16.mxu0 %v552
        %657 = vmatpush1.bf16.msra.mxu0 %v551
        %658 = vmatprep.subr.bf16.mxu0 %v554
        %659 = vmatpush1.bf16.msra.mxu0 %v553
        %660 = vmatprep.subr.bf16.mxu0 %v556
        %661 = vmatpush1.bf16.msra.mxu0 %v555
        %662 = vmatprep.subr.bf16.mxu0 %v558
        %663 = vmatpush1.bf16.msra.mxu0 %v557
        %664 = vmatprep.mubr.bf16.mxu0 %v418
        %665 = vmatmul.mubr.bf16.gmra.mrb[0].mxu0 %v417
        %v666 = vpop.f32.mrb[0].mxu0
        %v667 = vadd.f32 %v626, %v666
        %v668 = vpop.f32.mrb[0].mxu0
        %v669 = vadd.f32 %v628, %v668
        %v670 = vpop.f32.mrb[0].mxu0
        %v671 = vpop.f32.mrb[0].mxu0
        %672 = vdwg.mxu0
        %673 = vmatprep.subr.bf16.mxu0 %v528
        %674 = vmatpush1.bf16.msra.mxu0 %v527
        %675 = vmatprep.subr.bf16.mxu0 %v530
        %676 = vmatpush1.bf16.msra.mxu0 %v529
        %677 = vmatprep.subr.bf16.mxu0 %v532
        %678 = vmatpush1.bf16.msra.mxu0 %v531
        %679 = vmatprep.subr.bf16.mxu0 %v534
        %680 = vmatpush1.bf16.msra.mxu0 %v533
        %681 = vmatprep.subr.bf16.mxu0 %v536
        %682 = vmatpush1.bf16.msra.mxu0 %v535
        %683 = vmatprep.subr.bf16.mxu0 %v538
        %684 = vmatpush1.bf16.msra.mxu0 %v537
        %685 = vmatprep.subr.bf16.mxu0 %v540
        %686 = vmatpush1.bf16.msra.mxu0 %v539
        %687 = vmatprep.subr.bf16.mxu0 %v542
        %688 = vmatpush1.bf16.msra.mxu0 %v541
        %689 = vmatprep.subr.bf16.mxu0 %v544
        %690 = vmatpush1.bf16.msra.mxu0 %v543
        %691 = vmatprep.subr.bf16.mxu0 %v546
        %692 = vmatpush1.bf16.msra.mxu0 %v545
        %693 = vmatprep.subr.bf16.mxu0 %v548
        %694 = vmatpush1.bf16.msra.mxu0 %v547
        %695 = vmatprep.subr.bf16.mxu0 %v550
        %696 = vmatpush1.bf16.msra.mxu0 %v549
        %697 = vmatprep.subr.bf16.mxu0 %v552
        %698 = vmatpush1.bf16.msra.mxu0 %v551
        %699 = vmatprep.subr.bf16.mxu0 %v554
        %700 = vmatpush1.bf16.msra.mxu0 %v553
        %701 = vmatprep.subr.bf16.mxu0 %v556
        %702 = vmatpush1.bf16.msra.mxu0 %v555
        %703 = vmatprep.subr.bf16.mxu0 %v558
        %704 = vmatpush1.bf16.msra.mxu0 %v557
        %705 = vmatprep.mubr.bf16.mxu0 %v430
        %706 = vmatmul.mubr.bf16.gmra.mrb[0].mxu0 %v429
        %v707 = vpop.f32.mrb[0].mxu0
        %v708 = vadd.f32 0.0, %v707
        %v709 = vpop.f32.mrb[0].mxu0
        %v710 = vadd.f32 0.0, %v709
        %v711 = vpop.f32.mrb[0].mxu0
        %v712 = vpop.f32.mrb[0].mxu0
        %713 = vdwg.mxu0
        %v714 = vadd.f32 %v667, %v708
        %v715 = vadd.f32 %v669, %v710
        %v718 = vcombine.low %v714, %v715
        %720 = vst [vmem:[%s230] sm:$0xff] %v718
        %s721 = sand.u32 %s113, 1
        %s722 = scalar_lea.sflag [#allocation4], %s721
        %s723 = sand.u32 %s113, 1
        %s724 = smul.addr %s723, 8
        %s725 = scalar_lea.vmem [#allocation8], %s724
        // Predicated region
        $region45: #{tpu_custom_call.1} parent=31 // pred_check
          %p726 = pneg %p123
        $region46: #{tpu_custom_call.1} parent=31 // pred_check_branch
          %728 = sbr.rel (%p726) target = $region48
        $region47: #{tpu_custom_call.1} parent=31 // pred_region
          %s729 = smul.u32 2, %s26
          %s731 = ssub.s32 128, 128
          %732 = vsyncadd %s722, %s731
          %s733 = smul.addr %s25, 4
          %s734 = sadd.s32 %s729, %s733
          %s735 = smul.addr %s734, 64
          %s736 = scalar_lea.hbm %s3, %s735
          %s738 = sshll.u32 %s725, 4
          %s739 = int_to_ptr.vmem [resolvable:$true] %s738
          %741 = dma.vmem_to_hbm [thread:$0]  %s739, 128, %s736, %s722
        $region48: #{tpu_custom_call.1} parent=31 // pred_fallthru
          _
      $region32: #{tpu_custom_call.1} parent=5 // pred_fallthru
        _
      %p742 = scmp.le.s32.totalorder 2, %s16
      // Predicated region
      $region49: #{tpu_custom_call.1} parent=5 // pred_check
        %p743 = pneg %p742
      $region50: #{tpu_custom_call.1} parent=5 // pred_check_branch
        %745 = sbr.rel (%p743) target = $region52
      $region51: #{tpu_custom_call.1} parent=5 // pred_region
        %s746 = ssub.s32 %s16, 2
        // Predicated region
        $region53: #{tpu_custom_call.1} parent=51 // pred_check
          %p747 = pneg %p129
        $region54: #{tpu_custom_call.1} parent=51 // pred_check_branch
          %749 = sbr.rel (%p747) target = $region56
        $region55: #{tpu_custom_call.1} parent=51 // pred_region
          %s750 = sand.u32 %s114, 1
          %s751 = scalar_lea.sflag [#allocation4], %s750
          %s752 = sand.u32 %s114, 1
          %s753 = smul.addr %s752, 8
          %s754 = scalar_lea.vmem [#allocation8], %s753
          %755 = dma.done %s751, 128
        $region56: #{tpu_custom_call.1} parent=51 // pred_fallthru
          _
      $region52: #{tpu_custom_call.1} parent=5 // pred_fallthru
        _
    $region6: #{tpu_custom_call.1} parent=1 // loop_footer
      %s20 = sadd.s32 1, %s16
    $region7: #{tpu_custom_call.1} parent=1 // loop_footer_branch
      %15 = sbr.rel target = $region3
    $region8: #{tpu_custom_call.1} parent=1 // loop_exit
      _
    %756 = vsyncpa [#allocation3], 1
    %s757 = scalar_lea.sflag [#allocation3], 1
    %758 = vsyncpa %s757, 1
    %759 = vsyncpa [#allocation6], 1
    %760 = vsyncpa [#allocation4], 1
    %s761 = scalar_lea.sflag [#allocation4], 1
    %762 = vsyncpa %s761, 1

</llo_original>
